<compile_context>
chip_gen: v7x
topology: tpu7x:2x2x1
jax: 0.10.0
libtpu: 0.0.40
codegen_flags: <defaults>
</compile_context>

<pallas_src>
import functools

import jax
import jax.numpy as jnp
from jax import lax
from jax.experimental import pallas as pl
from jax.experimental.pallas import tpu as pltpu


def gsf_kernel(x_ref, wih_ref, whh_ref, bgi_ref, bhn_ref, wfc_ref, bfc_ref,
               o_ref, h_scr, gi_scr, hs_scr, *, chunk, batch, hidden):
    """One time-chunk of the GRU recurrence + FC head.

    x_ref:   (chunk*B, D)  f32   time-major rows for this chunk
    wih_ref: (D, 3H)       bf16  fused input weights   (gate order r, z, n)
    whh_ref: (H, 3H)       bf16  fused recurrent weights
    bgi_ref: (1, 3H)       f32   (b_ih_r + b_hh_r, b_ih_z + b_hh_z, b_ih_n)
    bhn_ref: (B, H)        f32   b_hh_n pre-broadcast (no per-step broadcast)
    wfc_ref: (H, D)        bf16  FC head weights
    bfc_ref: (1, D)        f32   FC head bias
    h_scr:   (B, H)        f32   hidden state carried across time chunks
    """
    TC, B, H = chunk, batch, hidden
    t = pl.program_id(0)

    # Reset the carried hidden state at the start of the sequence.
    @pl.when(t == 0)
    def _():
        h_scr[...] = jnp.zeros_like(h_scr)

    # ---- Hoisted input projection for this chunk: one bf16 MXU matmul. -----
    gi_scr[...] = (
        jnp.dot(x_ref[...].astype(jnp.bfloat16), wih_ref[...],
                preferred_element_type=jnp.float32)
        + bgi_ref[...]
    )

    # Hoisted loads, reused every step of the (partially) unrolled loop.
    whh = whh_ref[...]        # (H, 3H) bf16
    b_hn = bhn_ref[...]       # (B, H)  f32, already broadcast -> no per-step bcast

    def step(i, h):
        row = pl.multiple_of(i * B, B)          # sublane-aligned row block
        gi = gi_scr[pl.ds(row, B), :]           # (B, 3H) precomputed x-gates
        gh = jnp.dot(h.astype(jnp.bfloat16), whh,
                     preferred_element_type=jnp.float32)          # (B, 3H)

        r = jax.nn.sigmoid(gi[:, 0:H] + gh[:, 0:H])
        z = jax.nn.sigmoid(gi[:, H:2 * H] + gh[:, H:2 * H])
        n = jnp.tanh(gi[:, 2 * H:3 * H] + r * (gh[:, 2 * H:3 * H] + b_hn))
        h_new = (1.0 - z) * n + z * h

        hs_scr[pl.ds(row, B), :] = h_new
        return h_new

    # Bounded unroll keeps LLO scheduling visibility without vreg spills.
    h0 = h_scr[...]
    h_last = lax.fori_loop(0, TC, step, h0, unroll=min(TC, 8))
    h_scr[...] = h_last                         # carry to the next time chunk

    # ---- FC head for the chunk: one (chunk*B, H) x (H, D) bf16 matmul. -----
    y = (jnp.dot(hs_scr[...].astype(jnp.bfloat16), wfc_ref[...],
                 preferred_element_type=jnp.float32)
         + bfc_ref[...])
    o_ref[...] = y.astype(o_ref.dtype)


def fuse_params(w_ih, w_hh, b_ih, b_hh, w_fc, b_fc, batch):
    """One-time parameter fusion. Keep OUT of the per-call forward path."""
    H = w_hh.shape[-1]
    wih_cat = jnp.concatenate([w_ih[0], w_ih[1], w_ih[2]], axis=1)   # (D, 3H)
    whh_cat = jnp.concatenate([w_hh[0], w_hh[1], w_hh[2]], axis=1)   # (H, 3H)
    # Pre-sum the r/z biases from both paths; b_hh[n] must stay under r*(...).
    bgi_cat = jnp.concatenate(
        [b_ih[0] + b_hh[0], b_ih[1] + b_hh[1], b_ih[2]], axis=1)     # (1, 3H)
    b_hn = jnp.broadcast_to(b_hh[2], (batch, H))                     # (B, H)
    return (wih_cat.astype(jnp.bfloat16),
            whh_cat.astype(jnp.bfloat16),
            bgi_cat.astype(jnp.float32),
            b_hn.astype(jnp.float32),
            w_fc.astype(jnp.bfloat16),
            b_fc.astype(jnp.float32))


@functools.partial(jax.jit, static_argnames=("time_chunk",))
def gsf_forward(x, fused, *, time_chunk=4):
    """x: (B, L, D) f32. Returns (B, L, D). Matches nn.GRU(batch_first)+Linear."""
    wih_cat, whh_cat, bgi_cat, b_hn, w_fc, b_fc = fused
    B, L, D = x.shape
    H = whh_cat.shape[0]

    TC = min(time_chunk, L)
    assert L % TC == 0, "lookback must be a multiple of the time chunk"
    n_chunks = L // TC
    rows = TC * B

    # Time-major 2-D layout: timestep t occupies rows [t*B, t*B+B).
    x2d = jnp.transpose(x, (1, 0, 2)).reshape(L * B, D)

    # Generous VMEM budget sized from the actual footprint (f32/bf16 bytes).
    est = (2 * 2 * rows * D * 4                              # x + y blocks (dbl buf)
           + (D * 3 * H + H * 3 * H + H * D) * 2             # bf16 weights
           + (3 * H + B * H + D) * 4                         # biases
           + (B * H + rows * 3 * H + rows * H) * 4)          # scratch
    vmem_limit = int(min(64 * 1024 * 1024, max(4 * est, 4 * 1024 * 1024)))

    kernel = functools.partial(gsf_kernel, chunk=TC, batch=B, hidden=H)

    y2d = pl.pallas_call(
        kernel,
        out_shape=jax.ShapeDtypeStruct((L * B, D), x.dtype),
        grid_spec=pltpu.PrefetchScalarGridSpec(
            num_scalar_prefetch=0,
            grid=(n_chunks,),
            in_specs=[
                pl.BlockSpec((rows, D), lambda t: (t, 0)),        # x (per chunk)
                pl.BlockSpec((D, 3 * H), lambda t: (0, 0)),       # W_ih (resident)
                pl.BlockSpec((H, 3 * H), lambda t: (0, 0)),       # W_hh (resident)
                pl.BlockSpec((1, 3 * H), lambda t: (0, 0)),       # fused gate bias
                pl.BlockSpec((B, H), lambda t: (0, 0)),           # b_hh[n] broadcast
                pl.BlockSpec((H, D), lambda t: (0, 0)),           # W_fc
                pl.BlockSpec((1, D), lambda t: (0, 0)),           # b_fc
            ],
            out_specs=pl.BlockSpec((rows, D), lambda t: (t, 0)),
            scratch_shapes=[
                pltpu.VMEM((B, H), jnp.float32),          # hidden carry across chunks
                pltpu.VMEM((rows, 3 * H), jnp.float32),   # precomputed x-gates (chunk)
                pltpu.VMEM((rows, H), jnp.float32),       # hidden states (chunk)
            ],
        ),
        compiler_params=pltpu.CompilerParams(
            dimension_semantics=("arbitrary",),
            vmem_limit_bytes=vmem_limit,
        ),
    )(x2d, wih_cat, whh_cat, bgi_cat, b_hn, w_fc, b_fc)

    return jnp.transpose(y2d.reshape(L, B, D), (1, 0, 2))


def ref_gsf(x, w_ih, w_hh, b_ih, b_hh, w_fc, b_fc):
    """Pure-JAX f32 reference (matches PyTorch nn.GRU + nn.Linear semantics)."""
    B, L, D = x.shape
    H = w_hh.shape[-1]

    def step(h, xt):
        gi = [xt @ w_ih[g] + b_ih[g] for g in range(3)]
        gh = [h @ w_hh[g] + b_hh[g] for g in range(3)]
        r = jax.nn.sigmoid(gi[0] + gh[0])
        z = jax.nn.sigmoid(gi[1] + gh[1])
        n = jnp.tanh(gi[2] + r * gh[2])
        h_new = (1.0 - z) * n + z * h
        return h_new, h_new

    h0 = jnp.zeros((B, H), jnp.float32)
    _, hs = jax.lax.scan(step, h0, jnp.swapaxes(x, 0, 1))
    hs = jnp.swapaxes(hs, 0, 1)              # (B, L, H)
    return hs @ w_fc + b_fc


def init_params(key, data_dim, hidden_dim):
    """Deterministic synthetic init (xavier-uniform-like bounds)."""
    k = jax.random.split(key, 6)
    D, H = data_dim, hidden_dim
    bnd_ih = (6.0 / (D + H)) ** 0.5
    bnd_hh = (6.0 / (H + H)) ** 0.5
    bnd_b = 1.0 / (H ** 0.5)
    bnd_fc = (6.0 / (H + D)) ** 0.5
    # Gate order matches PyTorch: (r, z, n). Stored pre-transposed: (in, out).
    w_ih = jax.random.uniform(k[0], (3, D, H), jnp.float32, -bnd_ih, bnd_ih)
    w_hh = jax.random.uniform(k[1], (3, H, H), jnp.float32, -bnd_hh, bnd_hh)
    b_ih = jax.random.uniform(k[2], (3, 1, H), jnp.float32, -bnd_b, bnd_b)
    b_hh = jax.random.uniform(k[3], (3, 1, H), jnp.float32, -bnd_b, bnd_b)
    w_fc = jax.random.uniform(k[4], (H, D), jnp.float32, -bnd_fc, bnd_fc)
    b_fc = jax.random.uniform(k[5], (1, D), jnp.float32, -bnd_b, bnd_b)
    return w_ih, w_hh, b_ih, b_hh, w_fc, b_fc


if __name__ == "__main__":
    B, L, D, H = 8, 8, 4, 32   # batch, lookback, data_dim, hidden_dim

    key = jax.random.PRNGKey(0)
    kx, kp = jax.random.split(key)
    x = jax.random.normal(kx, (B, L, D), jnp.float32)
    params = init_params(kp, D, H)

    # One-time fusion (outside the per-call forward path).
    fused = fuse_params(*params, batch=B)

    # time_chunk=4 -> 2 grid steps, exercising the cross-chunk hidden carry.
    out = gsf_forward(x, fused, time_chunk=4)
    out = jax.block_until_ready(out)

    ref = ref_gsf(x, *params)
    assert out.shape == (B, L, D)
    # bf16 MXU operands (f32 accumulate/elementwise) vs. f32 reference.
    assert jnp.allclose(out, ref, atol=5e-2, rtol=5e-2), "mismatch vs reference"
    print("KERNEL_OK")
</pallas_src>

<mosaic_0001>
module attributes {stable_mosaic.version = 11 : i64} {
  func.func @gsf_kernel(%arg0: i32, %arg1: memref<32x4xf32, #tpu.memory_space<vmem>>, %arg2: memref<4x96xbf16, #tpu.memory_space<vmem>>, %arg3: memref<32x96xbf16, #tpu.memory_space<vmem>>, %arg4: memref<1x96xf32, #tpu.memory_space<vmem>>, %arg5: memref<8x32xf32, #tpu.memory_space<vmem>>, %arg6: memref<32x4xbf16, #tpu.memory_space<vmem>>, %arg7: memref<1x4xf32, #tpu.memory_space<vmem>>, %arg8: memref<32x4xf32, #tpu.memory_space<vmem>>, %arg9: memref<8x32xf32, #tpu.memory_space<vmem>>, %arg10: memref<32x96xf32, #tpu.memory_space<vmem>>, %arg11: memref<32x32xf32, #tpu.memory_space<vmem>>) attributes {dimension_semantics = [#tpu.dimension_semantics<arbitrary>], iteration_bounds = array<i64: 2>, scalar_prefetch = 0 : i64, scratch_operands = 3 : i64, tpu.core_type = #tpu.core_type<tc>, window_params = [{transform_indices = @transform_0, window_bounds = array<i64: 32, 4>}, {pipeline_mode = #tpu.pipeline_mode<synchronous>, transform_indices = @transform_1, window_bounds = array<i64: 4, 96>}, {pipeline_mode = #tpu.pipeline_mode<synchronous>, transform_indices = @transform_2, window_bounds = array<i64: 32, 96>}, {pipeline_mode = #tpu.pipeline_mode<synchronous>, transform_indices = @transform_3, window_bounds = array<i64: 1, 96>}, {pipeline_mode = #tpu.pipeline_mode<synchronous>, transform_indices = @transform_4, window_bounds = array<i64: 8, 32>}, {pipeline_mode = #tpu.pipeline_mode<synchronous>, transform_indices = @transform_5, window_bounds = array<i64: 32, 4>}, {pipeline_mode = #tpu.pipeline_mode<synchronous>, transform_indices = @transform_6, window_bounds = array<i64: 1, 4>}, {transform_indices = @transform_7, window_bounds = array<i64: 32, 4>}]} {
    %c0_i32 = arith.constant 0 : i32
    %0 = arith.cmpi eq, %arg0, %c0_i32 : i32
    %1 = arith.extui %0 : i1 to i32
    %c0_i32_0 = arith.constant 0 : i32
    %2 = arith.cmpi ne, %1, %c0_i32_0 : i32
    scf.if %2 {
      %cst_53 = arith.constant 0.000000e+00 : f32
      %163 = vector.broadcast %cst_53 : f32 to vector<8x32xf32>
      %c0_54 = arith.constant 0 : index
      %c0_55 = arith.constant 0 : index
      %164 = vector.load %arg9[%c0_54, %c0_55] : memref<8x32xf32, #tpu.memory_space<vmem>>, vector<8x32xf32>
      tpu.vector_store %arg9[%c0_54, %c0_55], %163 {strides = array<i32>} : memref<8x32xf32, #tpu.memory_space<vmem>>, vector<8x32xf32>,
    } else {
    }
    %c0 = arith.constant 0 : index
    %c0_1 = arith.constant 0 : index
    %3 = vector.load %arg1[%c0, %c0_1] : memref<32x4xf32, #tpu.memory_space<vmem>>, vector<32x4xf32>
    %4 = arith.truncf %3 : vector<32x4xf32> to vector<32x4xbf16>
    %c0_2 = arith.constant 0 : index
    %c0_3 = arith.constant 0 : index
    %5 = vector.load %arg2[%c0_2, %c0_3] : memref<4x96xbf16, #tpu.memory_space<vmem>>, vector<4x96xbf16>
    %cst = arith.constant dense<0.000000e+00> : vector<32x96xf32>
    %6 = tpu.matmul %4, %5, %cst {dimension_numbers = #tpu.dot_dimension_numbers<[1], [0], [0], [1], [0, 0, 1, 1], [], []>} : vector<32x4xbf16>, vector<4x96xbf16>, vector<32x96xf32> -> vector<32x96xf32>
    %c0_4 = arith.constant 0 : index
    %c0_5 = arith.constant 0 : index
    %7 = vector.load %arg4[%c0_4, %c0_5] : memref<1x96xf32, #tpu.memory_space<vmem>>, vector<1x96xf32>
    %8 = vector.broadcast %7 : vector<1x96xf32> to vector<32x96xf32>
    %9 = arith.addf %6, %8 : vector<32x96xf32>
    %c0_6 = arith.constant 0 : index
    %c0_7 = arith.constant 0 : index
    %10 = vector.load %arg10[%c0_6, %c0_7] : memref<32x96xf32, #tpu.memory_space<vmem>>, vector<32x96xf32>
    tpu.vector_store %arg10[%c0_6, %c0_7], %9 {strides = array<i32>} : memref<32x96xf32, #tpu.memory_space<vmem>>, vector<32x96xf32>,
    %c0_8 = arith.constant 0 : index
    %c0_9 = arith.constant 0 : index
    %11 = vector.load %arg3[%c0_8, %c0_9] : memref<32x96xbf16, #tpu.memory_space<vmem>>, vector<32x96xbf16>
    %c0_10 = arith.constant 0 : index
    %c0_11 = arith.constant 0 : index
    %12 = vector.load %arg5[%c0_10, %c0_11] : memref<8x32xf32, #tpu.memory_space<vmem>>, vector<8x32xf32>
    %c0_12 = arith.constant 0 : index
    %c0_13 = arith.constant 0 : index
    %13 = vector.load %arg9[%c0_12, %c0_13] : memref<8x32xf32, #tpu.memory_space<vmem>>, vector<8x32xf32>
    %c0_i32_14 = arith.constant 0 : i32
    %c8_i32 = arith.constant 8 : i32
    %14 = arith.muli %c0_i32_14, %c8_i32 : i32
    %15 = tpu.assume_multiple %14, 8 : i32
    %16 = arith.index_cast %15 : i32 to index
    %c0_15 = arith.constant 0 : index
    %17 = vector.load %arg10[%16, %c0_15] : memref<32x96xf32, #tpu.memory_space<vmem>>, vector<8x96xf32>
    %18 = arith.truncf %13 : vector<8x32xf32> to vector<8x32xbf16>
    %cst_16 = arith.constant dense<0.000000e+00> : vector<8x96xf32>
    %19 = tpu.matmul %18, %11, %cst_16 {dimension_numbers = #tpu.dot_dimension_numbers<[1], [0], [0], [1], [0, 0, 1, 1], [], []>} : vector<8x32xbf16>, vector<32x96xbf16>, vector<8x96xf32> -> vector<8x96xf32>
    %20 = vector.extract_strided_slice %17 {offsets = [0, 0], sizes = [8, 32], strides = [1, 1]} : vector<8x96xf32> to vector<8x32xf32>
    %21 = vector.extract_strided_slice %19 {offsets = [0, 0], sizes = [8, 32], strides = [1, 1]} : vector<8x96xf32> to vector<8x32xf32>
    %22 = arith.addf %20, %21 : vector<8x32xf32>
    %23 = arith.negf %22 : vector<8x32xf32>
    %24 = math.exp %23 : vector<8x32xf32>
    %cst_17 = arith.constant 1.000000e+00 : f32
    %25 = vector.broadcast %cst_17 : f32 to vector<8x32xf32>
    %26 = arith.addf %25, %24 : vector<8x32xf32>
    %27 = arith.divf %25, %26 : vector<8x32xf32>
    %28 = vector.extract_strided_slice %17 {offsets = [0, 32], sizes = [8, 32], strides = [1, 1]} : vector<8x96xf32> to vector<8x32xf32>
    %29 = vector.extract_strided_slice %19 {offsets = [0, 32], sizes = [8, 32], strides = [1, 1]} : vector<8x96xf32> to vector<8x32xf32>
    %30 = arith.addf %28, %29 : vector<8x32xf32>
    %31 = arith.negf %30 : vector<8x32xf32>
    %32 = math.exp %31 : vector<8x32xf32>
    %cst_18 = arith.constant 1.000000e+00 : f32
    %33 = vector.broadcast %cst_18 : f32 to vector<8x32xf32>
    %34 = arith.addf %33, %32 : vector<8x32xf32>
    %35 = arith.divf %33, %34 : vector<8x32xf32>
    %36 = vector.extract_strided_slice %17 {offsets = [0, 64], sizes = [8, 32], strides = [1, 1]} : vector<8x96xf32> to vector<8x32xf32>
    %37 = vector.extract_strided_slice %19 {offsets = [0, 64], sizes = [8, 32], strides = [1, 1]} : vector<8x96xf32> to vector<8x32xf32>
    %38 = arith.addf %37, %12 : vector<8x32xf32>
    %39 = arith.mulf %27, %38 : vector<8x32xf32>
    %40 = arith.addf %36, %39 : vector<8x32xf32>
    %41 = math.tanh %40 : vector<8x32xf32>
    %cst_19 = arith.constant 1.000000e+00 : f32
    %42 = vector.broadcast %cst_19 : f32 to vector<8x32xf32>
    %43 = arith.subf %42, %35 : vector<8x32xf32>
    %44 = arith.mulf %43, %41 : vector<8x32xf32>
    %45 = arith.mulf %35, %13 : vector<8x32xf32>
    %46 = arith.addf %44, %45 : vector<8x32xf32>
    %47 = arith.index_cast %15 : i32 to index
    %c0_20 = arith.constant 0 : index
    %48 = vector.load %arg11[%47, %c0_20] : memref<32x32xf32, #tpu.memory_space<vmem>>, vector<8x32xf32>
    tpu.vector_store %arg11[%47, %c0_20], %46 {strides = array<i32>} : memref<32x32xf32, #tpu.memory_space<vmem>>, vector<8x32xf32>,
    %c1_i32 = arith.constant 1 : i32
    %c8_i32_21 = arith.constant 8 : i32
    %49 = arith.muli %c1_i32, %c8_i32_21 : i32
    %50 = tpu.assume_multiple %49, 8 : i32
    %51 = arith.index_cast %50 : i32 to index
    %c0_22 = arith.constant 0 : index
    %52 = vector.load %arg10[%51, %c0_22] : memref<32x96xf32, #tpu.memory_space<vmem>>, vector<8x96xf32>
    %53 = arith.truncf %46 : vector<8x32xf32> to vector<8x32xbf16>
    %cst_23 = arith.constant dense<0.000000e+00> : vector<8x96xf32>
    %54 = tpu.matmul %53, %11, %cst_23 {dimension_numbers = #tpu.dot_dimension_numbers<[1], [0], [0], [1], [0, 0, 1, 1], [], []>} : vector<8x32xbf16>, vector<32x96xbf16>, vector<8x96xf32> -> vector<8x96xf32>
    %55 = vector.extract_strided_slice %52 {offsets = [0, 0], sizes = [8, 32], strides = [1, 1]} : vector<8x96xf32> to vector<8x32xf32>
    %56 = vector.extract_strided_slice %54 {offsets = [0, 0], sizes = [8, 32], strides = [1, 1]} : vector<8x96xf32> to vector<8x32xf32>
    %57 = arith.addf %55, %56 : vector<8x32xf32>
    %58 = arith.negf %57 : vector<8x32xf32>
    %59 = math.exp %58 : vector<8x32xf32>
    %cst_24 = arith.constant 1.000000e+00 : f32
    %60 = vector.broadcast %cst_24 : f32 to vector<8x32xf32>
    %61 = arith.addf %60, %59 : vector<8x32xf32>
    %62 = arith.divf %60, %61 : vector<8x32xf32>
    %63 = vector.extract_strided_slice %52 {offsets = [0, 32], sizes = [8, 32], strides = [1, 1]} : vector<8x96xf32> to vector<8x32xf32>
    %64 = vector.extract_strided_slice %54 {offsets = [0, 32], sizes = [8, 32], strides = [1, 1]} : vector<8x96xf32> to vector<8x32xf32>
    %65 = arith.addf %63, %64 : vector<8x32xf32>
    %66 = arith.negf %65 : vector<8x32xf32>
    %67 = math.exp %66 : vector<8x32xf32>
    %cst_25 = arith.constant 1.000000e+00 : f32
    %68 = vector.broadcast %cst_25 : f32 to vector<8x32xf32>
    %69 = arith.addf %68, %67 : vector<8x32xf32>
    %70 = arith.divf %68, %69 : vector<8x32xf32>
    %71 = vector.extract_strided_slice %52 {offsets = [0, 64], sizes = [8, 32], strides = [1, 1]} : vector<8x96xf32> to vector<8x32xf32>
    %72 = vector.extract_strided_slice %54 {offsets = [0, 64], sizes = [8, 32], strides = [1, 1]} : vector<8x96xf32> to vector<8x32xf32>
    %73 = arith.addf %72, %12 : vector<8x32xf32>
    %74 = arith.mulf %62, %73 : vector<8x32xf32>
    %75 = arith.addf %71, %74 : vector<8x32xf32>
    %76 = math.tanh %75 : vector<8x32xf32>
    %cst_26 = arith.constant 1.000000e+00 : f32
    %77 = vector.broadcast %cst_26 : f32 to vector<8x32xf32>
    %78 = arith.subf %77, %70 : vector<8x32xf32>
    %79 = arith.mulf %78, %76 : vector<8x32xf32>
    %80 = arith.mulf %70, %46 : vector<8x32xf32>
    %81 = arith.addf %79, %80 : vector<8x32xf32>
    %82 = arith.index_cast %50 : i32 to index
    %c0_27 = arith.constant 0 : index
    %83 = vector.load %arg11[%82, %c0_27] : memref<32x32xf32, #tpu.memory_space<vmem>>, vector<8x32xf32>
    tpu.vector_store %arg11[%82, %c0_27], %81 {strides = array<i32>} : memref<32x32xf32, #tpu.memory_space<vmem>>, vector<8x32xf32>,
    %c2_i32 = arith.constant 2 : i32
    %c8_i32_28 = arith.constant 8 : i32
    %84 = arith.muli %c2_i32, %c8_i32_28 : i32
    %85 = tpu.assume_multiple %84, 8 : i32
    %86 = arith.index_cast %85 : i32 to index
    %c0_29 = arith.constant 0 : index
    %87 = vector.load %arg10[%86, %c0_29] : memref<32x96xf32, #tpu.memory_space<vmem>>, vector<8x96xf32>
    %88 = arith.truncf %81 : vector<8x32xf32> to vector<8x32xbf16>
    %cst_30 = arith.constant dense<0.000000e+00> : vector<8x96xf32>
    %89 = tpu.matmul %88, %11, %cst_30 {dimension_numbers = #tpu.dot_dimension_numbers<[1], [0], [0], [1], [0, 0, 1, 1], [], []>} : vector<8x32xbf16>, vector<32x96xbf16>, vector<8x96xf32> -> vector<8x96xf32>
    %90 = vector.extract_strided_slice %87 {offsets = [0, 0], sizes = [8, 32], strides = [1, 1]} : vector<8x96xf32> to vector<8x32xf32>
    %91 = vector.extract_strided_slice %89 {offsets = [0, 0], sizes = [8, 32], strides = [1, 1]} : vector<8x96xf32> to vector<8x32xf32>
    %92 = arith.addf %90, %91 : vector<8x32xf32>
    %93 = arith.negf %92 : vector<8x32xf32>
    %94 = math.exp %93 : vector<8x32xf32>
    %cst_31 = arith.constant 1.000000e+00 : f32
    %95 = vector.broadcast %cst_31 : f32 to vector<8x32xf32>
    %96 = arith.addf %95, %94 : vector<8x32xf32>
    %97 = arith.divf %95, %96 : vector<8x32xf32>
    %98 = vector.extract_strided_slice %87 {offsets = [0, 32], sizes = [8, 32], strides = [1, 1]} : vector<8x96xf32> to vector<8x32xf32>
    %99 = vector.extract_strided_slice %89 {offsets = [0, 32], sizes = [8, 32], strides = [1, 1]} : vector<8x96xf32> to vector<8x32xf32>
    %100 = arith.addf %98, %99 : vector<8x32xf32>
    %101 = arith.negf %100 : vector<8x32xf32>
    %102 = math.exp %101 : vector<8x32xf32>
    %cst_32 = arith.constant 1.000000e+00 : f32
    %103 = vector.broadcast %cst_32 : f32 to vector<8x32xf32>
    %104 = arith.addf %103, %102 : vector<8x32xf32>
    %105 = arith.divf %103, %104 : vector<8x32xf32>
    %106 = vector.extract_strided_slice %87 {offsets = [0, 64], sizes = [8, 32], strides = [1, 1]} : vector<8x96xf32> to vector<8x32xf32>
    %107 = vector.extract_strided_slice %89 {offsets = [0, 64], sizes = [8, 32], strides = [1, 1]} : vector<8x96xf32> to vector<8x32xf32>
    %108 = arith.addf %107, %12 : vector<8x32xf32>
    %109 = arith.mulf %97, %108 : vector<8x32xf32>
    %110 = arith.addf %106, %109 : vector<8x32xf32>
    %111 = math.tanh %110 : vector<8x32xf32>
    %cst_33 = arith.constant 1.000000e+00 : f32
    %112 = vector.broadcast %cst_33 : f32 to vector<8x32xf32>
    %113 = arith.subf %112, %105 : vector<8x32xf32>
    %114 = arith.mulf %113, %111 : vector<8x32xf32>
    %115 = arith.mulf %105, %81 : vector<8x32xf32>
    %116 = arith.addf %114, %115 : vector<8x32xf32>
    %117 = arith.index_cast %85 : i32 to index
    %c0_34 = arith.constant 0 : index
    %118 = vector.load %arg11[%117, %c0_34] : memref<32x32xf32, #tpu.memory_space<vmem>>, vector<8x32xf32>
    tpu.vector_store %arg11[%117, %c0_34], %116 {strides = array<i32>} : memref<32x32xf32, #tpu.memory_space<vmem>>, vector<8x32xf32>,
    %c3_i32 = arith.constant 3 : i32
    %c8_i32_35 = arith.constant 8 : i32
    %119 = arith.muli %c3_i32, %c8_i32_35 : i32
    %120 = tpu.assume_multiple %119, 8 : i32
    %121 = arith.index_cast %120 : i32 to index
    %c0_36 = arith.constant 0 : index
    %122 = vector.load %arg10[%121, %c0_36] : memref<32x96xf32, #tpu.memory_space<vmem>>, vector<8x96xf32>
    %123 = arith.truncf %116 : vector<8x32xf32> to vector<8x32xbf16>
    %cst_37 = arith.constant dense<0.000000e+00> : vector<8x96xf32>
    %124 = tpu.matmul %123, %11, %cst_37 {dimension_numbers = #tpu.dot_dimension_numbers<[1], [0], [0], [1], [0, 0, 1, 1], [], []>} : vector<8x32xbf16>, vector<32x96xbf16>, vector<8x96xf32> -> vector<8x96xf32>
    %125 = vector.extract_strided_slice %122 {offsets = [0, 0], sizes = [8, 32], strides = [1, 1]} : vector<8x96xf32> to vector<8x32xf32>
    %126 = vector.extract_strided_slice %124 {offsets = [0, 0], sizes = [8, 32], strides = [1, 1]} : vector<8x96xf32> to vector<8x32xf32>
    %127 = arith.addf %125, %126 : vector<8x32xf32>
    %128 = arith.negf %127 : vector<8x32xf32>
    %129 = math.exp %128 : vector<8x32xf32>
    %cst_38 = arith.constant 1.000000e+00 : f32
    %130 = vector.broadcast %cst_38 : f32 to vector<8x32xf32>
    %131 = arith.addf %130, %129 : vector<8x32xf32>
    %132 = arith.divf %130, %131 : vector<8x32xf32>
    %133 = vector.extract_strided_slice %122 {offsets = [0, 32], sizes = [8, 32], strides = [1, 1]} : vector<8x96xf32> to vector<8x32xf32>
    %134 = vector.extract_strided_slice %124 {offsets = [0, 32], sizes = [8, 32], strides = [1, 1]} : vector<8x96xf32> to vector<8x32xf32>
    %135 = arith.addf %133, %134 : vector<8x32xf32>
    %136 = arith.negf %135 : vector<8x32xf32>
    %137 = math.exp %136 : vector<8x32xf32>
    %cst_39 = arith.constant 1.000000e+00 : f32
    %138 = vector.broadcast %cst_39 : f32 to vector<8x32xf32>
    %139 = arith.addf %138, %137 : vector<8x32xf32>
    %140 = arith.divf %138, %139 : vector<8x32xf32>
    %141 = vector.extract_strided_slice %122 {offsets = [0, 64], sizes = [8, 32], strides = [1, 1]} : vector<8x96xf32> to vector<8x32xf32>
    %142 = vector.extract_strided_slice %124 {offsets = [0, 64], sizes = [8, 32], strides = [1, 1]} : vector<8x96xf32> to vector<8x32xf32>
    %143 = arith.addf %142, %12 : vector<8x32xf32>
    %144 = arith.mulf %132, %143 : vector<8x32xf32>
    %145 = arith.addf %141, %144 : vector<8x32xf32>
    %146 = math.tanh %145 : vector<8x32xf32>
    %cst_40 = arith.constant 1.000000e+00 : f32
    %147 = vector.broadcast %cst_40 : f32 to vector<8x32xf32>
    %148 = arith.subf %147, %140 : vector<8x32xf32>
    %149 = arith.mulf %148, %146 : vector<8x32xf32>
    %150 = arith.mulf %140, %116 : vector<8x32xf32>
    %151 = arith.addf %149, %150 : vector<8x32xf32>
    %152 = arith.index_cast %120 : i32 to index
    %c0_41 = arith.constant 0 : index
    %153 = vector.load %arg11[%152, %c0_41] : memref<32x32xf32, #tpu.memory_space<vmem>>, vector<8x32xf32>
    tpu.vector_store %arg11[%152, %c0_41], %151 {strides = array<i32>} : memref<32x32xf32, #tpu.memory_space<vmem>>, vector<8x32xf32>,
    %c4_i32 = arith.constant 4 : i32
    %c0_42 = arith.constant 0 : index
    %c0_43 = arith.constant 0 : index
    %154 = vector.load %arg9[%c0_42, %c0_43] : memref<8x32xf32, #tpu.memory_space<vmem>>, vector<8x32xf32>
    tpu.vector_store %arg9[%c0_42, %c0_43], %151 {strides = array<i32>} : memref<8x32xf32, #tpu.memory_space<vmem>>, vector<8x32xf32>,
    %c0_44 = arith.constant 0 : index
    %c0_45 = arith.constant 0 : index
    %155 = vector.load %arg11[%c0_44, %c0_45] : memref<32x32xf32, #tpu.memory_space<vmem>>, vector<32x32xf32>
    %156 = arith.truncf %155 : vector<32x32xf32> to vector<32x32xbf16>
    %c0_46 = arith.constant 0 : index
    %c0_47 = arith.constant 0 : index
    %157 = vector.load %arg6[%c0_46, %c0_47] : memref<32x4xbf16, #tpu.memory_space<vmem>>, vector<32x4xbf16>
    %cst_48 = arith.constant dense<0.000000e+00> : vector<32x4xf32>
    %158 = tpu.matmul %156, %157, %cst_48 {dimension_numbers = #tpu.dot_dimension_numbers<[1], [0], [0], [1], [0, 0, 1, 1], [], []>} : vector<32x32xbf16>, vector<32x4xbf16>, vector<32x4xf32> -> vector<32x4xf32>
    %c0_49 = arith.constant 0 : index
    %c0_50 = arith.constant 0 : index
    %159 = vector.load %arg7[%c0_49, %c0_50] : memref<1x4xf32, #tpu.memory_space<vmem>>, vector<1x4xf32>
    %160 = vector.broadcast %159 : vector<1x4xf32> to vector<32x4xf32>
    %161 = arith.addf %158, %160 : vector<32x4xf32>
    %c0_51 = arith.constant 0 : index
    %c0_52 = arith.constant 0 : index
    %162 = vector.load %arg8[%c0_51, %c0_52] : memref<32x4xf32, #tpu.memory_space<vmem>>, vector<32x4xf32>
    tpu.vector_store %arg8[%c0_51, %c0_52], %161 {strides = array<i32>} : memref<32x4xf32, #tpu.memory_space<vmem>>, vector<32x4xf32>,
    return
  }
  func.func @transform_0(%arg0: i32) -> (i32, i32) {
    %c0_i32 = arith.constant 0 : i32
    %c0_i32_0 = arith.constant 0 : i32
    return %arg0, %c0_i32 : i32, i32
  }
  func.func @transform_1(%arg0: i32) -> (i32, i32) {
    %c0_i32 = arith.constant 0 : i32
    %c0_i32_0 = arith.constant 0 : i32
    %c0_i32_1 = arith.constant 0 : i32
    return %c0_i32, %c0_i32_0 : i32, i32
  }
  func.func @transform_2(%arg0: i32) -> (i32, i32) {
    %c0_i32 = arith.constant 0 : i32
    %c0_i32_0 = arith.constant 0 : i32
    %c0_i32_1 = arith.constant 0 : i32
    return %c0_i32, %c0_i32_0 : i32, i32
  }
  func.func @transform_3(%arg0: i32) -> (i32, i32) {
    %c0_i32 = arith.constant 0 : i32
    %c0_i32_0 = arith.constant 0 : i32
    %c0_i32_1 = arith.constant 0 : i32
    return %c0_i32, %c0_i32_0 : i32, i32
  }
  func.func @transform_4(%arg0: i32) -> (i32, i32) {
    %c0_i32 = arith.constant 0 : i32
    %c0_i32_0 = arith.constant 0 : i32
    %c0_i32_1 = arith.constant 0 : i32
    return %c0_i32, %c0_i32_0 : i32, i32
  }
  func.func @transform_5(%arg0: i32) -> (i32, i32) {
    %c0_i32 = arith.constant 0 : i32
    %c0_i32_0 = arith.constant 0 : i32
    %c0_i32_1 = arith.constant 0 : i32
    return %c0_i32, %c0_i32_0 : i32, i32
  }
  func.func @transform_6(%arg0: i32) -> (i32, i32) {
    %c0_i32 = arith.constant 0 : i32
    %c0_i32_0 = arith.constant 0 : i32
    %c0_i32_1 = arith.constant 0 : i32
    return %c0_i32, %c0_i32_0 : i32, i32
  }
  func.func @transform_7(%arg0: i32) -> (i32, i32) {
    %c0_i32 = arith.constant 0 : i32
    %c0_i32_0 = arith.constant 0 : i32
    return %arg0, %c0_i32 : i32, i32
  }
}

</mosaic_0001>

<llo_original>
// kernel: gsf_forward.1
$region0: #{gsf_forward.1}
  #allocation0 [shape = 'u32[]', space=smem, size = 0x4, offset = 0x4, fixed_abs, tag = 'smem constant byte address 0x4 - core index']
  #allocation1 [shape = 'u32[144,128]{1,0:T(1,128)}', space=vmem, size = 0x12000, scoped, tag = 'internal scratch']
  #allocation2 [shape = 'f32[8,32]{1,0:T(8,128)}', space=vmem, size = 0x1000, scoped, tag = 'scratch operand']
  #allocation3 [shape = 'f32[32,96]{1,0:T(8,128)}', space=vmem, size = 0x4000, scoped, tag = 'scratch operand']
  #allocation4 [shape = 'f32[32,32]{1,0:T(8,128)}', space=vmem, size = 0x4000, scoped, tag = 'scratch operand']
  %s0 = inlined_call_operand.vmem [shape: f32[64,4], index: 0, kind: input, shape index: {}]
  %s1 = inlined_call_operand.vmem [shape: bf16[4,96], index: 1, kind: input, shape index: {}]
  %s2 = inlined_call_operand.vmem [shape: bf16[32,96], index: 2, kind: input, shape index: {}]
  %s3 = inlined_call_operand.vmem [shape: f32[1,96], index: 3, kind: input, shape index: {}]
  %s4 = inlined_call_operand.vmem [shape: f32[8,32], index: 4, kind: input, shape index: {}]
  %s5 = inlined_call_operand.vmem [shape: bf16[32,4], index: 5, kind: input, shape index: {}]
  %s6 = inlined_call_operand.vmem [shape: f32[1,4], index: 6, kind: input, shape index: {}]
  %s7 = inlined_call_operand.vmem [shape: f32[64,4], index: 7, kind: output, shape index: {}]
  %s8 = sld [smem:[#allocation0]]
  $region65: #{gsf_forward.1} parent=0
    _
  %s10 = ssub.s32 1, %s8
  %s11 = scalar_select 0, %s10, %s8
  loop: start=0, step=1, limit=4
  $region2: #{gsf_forward.1} parent=0 // loop_pre_header
    _
  $region3: #{gsf_forward.1} parent=0 // loop_header
    %s13 = sphi 0, %s17
    %p14 = scmp.ge.s32.totalorder %s13, 4
    %s23 = sphi 0, %s25
    %s26 = sphi 0, %s23
    %s27 = sphi 0, %s26
    %s43 = sphi 0, %s27
    %s47 = sphi 0, %s47
    %s49 = sphi 0, %s47
    %s50 = sphi 0, %s49
    %s64 = sphi 0, %s50
    %s68 = sphi 0, %s68
    %s70 = sphi 0, %s68
    %s71 = sphi 0, %s70
    %s85 = sphi 0, %s71
    %s89 = sphi 0, %s89
    %s91 = sphi 0, %s89
    %s92 = sphi 0, %s91
    %s106 = sphi 0, %s92
    %s110 = sphi 0, %s110
    %s112 = sphi 0, %s110
    %s113 = sphi 0, %s112
    %s127 = sphi 0, %s113
    %s131 = sphi 0, %s131
    %s133 = sphi 0, %s131
    %s134 = sphi 0, %s133
    %s148 = sphi 0, %s134
    %s152 = sphi 0, %s152
    %s154 = sphi 0, %s152
    %s155 = sphi 0, %s154
    %s169 = sphi 0, %s155
    %s175 = sphi 0, %s177
    %s178 = sphi 0, %s175
    %s179 = sphi 0, %s178
    %s195 = sphi 0, %s179
  $region4: #{gsf_forward.1} parent=0 // loop_header_branch
    %16 = sbr.rel (%p14) target = $region8
  $region5: #{gsf_forward.1} parent=0 // loop_body
    %s18 = ssub.s32 %s13, 1
    %s19 = ssub.s32 %s13, 2
    %s20 = sadd.s32 %s13, 1
    %s21 = ssub.s32 %s13, %s20
    %p22 = scmp.eq.s32.totalorder %s21, 0
    %s24 = sadd.s32 %s23, 1
    %s25 = scalar_select %p22, %s23, %s24
    %p28 = pneg %p22
    %p29 = scmp.eq.s32.totalorder %s13, 1
    %p30 = por %p28, %p29
    %p31 = scmp.ne.s32.totalorder %s23, %s26
    %p32 = scmp.eq.s32.totalorder %s13, 0
    %p33 = por %p31, %p32
    %p34 = scmp.ne.s32.totalorder %s23, %s26
    %p35 = scmp.eq.s32.totalorder %s18, 1
    %p36 = por %p34, %p35
    %p37 = scmp.ne.s32.totalorder %s26, %s27
    %p38 = scmp.eq.s32.totalorder %s18, 0
    %p39 = por %p37, %p38
    %p40 = scmp.ne.s32.totalorder %s26, %s27
    %p41 = scmp.eq.s32.totalorder %s19, 1
    %p42 = por %p40, %p41
    %p44 = scmp.ne.s32.totalorder %s27, %s43
    %p45 = scmp.eq.s32.totalorder %s19, 0
    %p46 = por %p44, %p45
    %s48 = sadd.s32 %s47, 1
    %p51 = scmp.eq.s32.totalorder %s13, 1
    %p52 = scmp.ne.s32.totalorder %s47, %s49
    %p53 = scmp.eq.s32.totalorder %s13, 0
    %p54 = por %p52, %p53
    %p55 = scmp.ne.s32.totalorder %s47, %s49
    %p56 = scmp.eq.s32.totalorder %s18, 1
    %p57 = por %p55, %p56
    %p58 = scmp.ne.s32.totalorder %s49, %s50
    %p59 = scmp.eq.s32.totalorder %s18, 0
    %p60 = por %p58, %p59
    %p61 = scmp.ne.s32.totalorder %s49, %s50
    %p62 = scmp.eq.s32.totalorder %s19, 1
    %p63 = por %p61, %p62
    %p65 = scmp.ne.s32.totalorder %s50, %s64
    %p66 = scmp.eq.s32.totalorder %s19, 0
    %p67 = por %p65, %p66
    %s69 = sadd.s32 %s68, 1
    %p72 = scmp.eq.s32.totalorder %s13, 1
    %p73 = scmp.ne.s32.totalorder %s68, %s70
    %p74 = scmp.eq.s32.totalorder %s13, 0
    %p75 = por %p73, %p74
    %p76 = scmp.ne.s32.totalorder %s68, %s70
    %p77 = scmp.eq.s32.totalorder %s18, 1
    %p78 = por %p76, %p77
    %p79 = scmp.ne.s32.totalorder %s70, %s71
    %p80 = scmp.eq.s32.totalorder %s18, 0
    %p81 = por %p79, %p80
    %p82 = scmp.ne.s32.totalorder %s70, %s71
    %p83 = scmp.eq.s32.totalorder %s19, 1
    %p84 = por %p82, %p83
    %p86 = scmp.ne.s32.totalorder %s71, %s85
    %p87 = scmp.eq.s32.totalorder %s19, 0
    %p88 = por %p86, %p87
    %s90 = sadd.s32 %s89, 1
    %p93 = scmp.eq.s32.totalorder %s13, 1
    %p94 = scmp.ne.s32.totalorder %s89, %s91
    %p95 = scmp.eq.s32.totalorder %s13, 0
    %p96 = por %p94, %p95
    %p97 = scmp.ne.s32.totalorder %s89, %s91
    %p98 = scmp.eq.s32.totalorder %s18, 1
    %p99 = por %p97, %p98
    %p100 = scmp.ne.s32.totalorder %s91, %s92
    %p101 = scmp.eq.s32.totalorder %s18, 0
    %p102 = por %p100, %p101
    %p103 = scmp.ne.s32.totalorder %s91, %s92
    %p104 = scmp.eq.s32.totalorder %s19, 1
    %p105 = por %p103, %p104
    %p107 = scmp.ne.s32.totalorder %s92, %s106
    %p108 = scmp.eq.s32.totalorder %s19, 0
    %p109 = por %p107, %p108
    %s111 = sadd.s32 %s110, 1
    %p114 = scmp.eq.s32.totalorder %s13, 1
    %p115 = scmp.ne.s32.totalorder %s110, %s112
    %p116 = scmp.eq.s32.totalorder %s13, 0
    %p117 = por %p115, %p116
    %p118 = scmp.ne.s32.totalorder %s110, %s112
    %p119 = scmp.eq.s32.totalorder %s18, 1
    %p120 = por %p118, %p119
    %p121 = scmp.ne.s32.totalorder %s112, %s113
    %p122 = scmp.eq.s32.totalorder %s18, 0
    %p123 = por %p121, %p122
    %p124 = scmp.ne.s32.totalorder %s112, %s113
    %p125 = scmp.eq.s32.totalorder %s19, 1
    %p126 = por %p124, %p125
    %p128 = scmp.ne.s32.totalorder %s113, %s127
    %p129 = scmp.eq.s32.totalorder %s19, 0
    %p130 = por %p128, %p129
    %s132 = sadd.s32 %s131, 1
    %p135 = scmp.eq.s32.totalorder %s13, 1
    %p136 = scmp.ne.s32.totalorder %s131, %s133
    %p137 = scmp.eq.s32.totalorder %s13, 0
    %p138 = por %p136, %p137
    %p139 = scmp.ne.s32.totalorder %s131, %s133
    %p140 = scmp.eq.s32.totalorder %s18, 1
    %p141 = por %p139, %p140
    %p142 = scmp.ne.s32.totalorder %s133, %s134
    %p143 = scmp.eq.s32.totalorder %s18, 0
    %p144 = por %p142, %p143
    %p145 = scmp.ne.s32.totalorder %s133, %s134
    %p146 = scmp.eq.s32.totalorder %s19, 1
    %p147 = por %p145, %p146
    %p149 = scmp.ne.s32.totalorder %s134, %s148
    %p150 = scmp.eq.s32.totalorder %s19, 0
    %p151 = por %p149, %p150
    %s153 = sadd.s32 %s152, 1
    %p156 = scmp.eq.s32.totalorder %s13, 1
    %p157 = scmp.ne.s32.totalorder %s152, %s154
    %p158 = scmp.eq.s32.totalorder %s13, 0
    %p159 = por %p157, %p158
    %p160 = scmp.ne.s32.totalorder %s152, %s154
    %p161 = scmp.eq.s32.totalorder %s18, 1
    %p162 = por %p160, %p161
    %p163 = scmp.ne.s32.totalorder %s154, %s155
    %p164 = scmp.eq.s32.totalorder %s18, 0
    %p165 = por %p163, %p164
    %p166 = scmp.ne.s32.totalorder %s154, %s155
    %p167 = scmp.eq.s32.totalorder %s19, 1
    %p168 = por %p166, %p167
    %p170 = scmp.ne.s32.totalorder %s155, %s169
    %p171 = scmp.eq.s32.totalorder %s19, 0
    %p172 = por %p170, %p171
    %s173 = ssub.s32 %s13, %s20
    %p174 = scmp.eq.s32.totalorder %s173, 0
    %s176 = sadd.s32 %s175, 1
    %s177 = scalar_select %p174, %s175, %s176
    %p180 = pneg %p174
    %p181 = scmp.eq.s32.totalorder %s13, 1
    %p182 = por %p180, %p181
    %p183 = scmp.ne.s32.totalorder %s175, %s178
    %p184 = scmp.eq.s32.totalorder %s13, 0
    %p185 = por %p183, %p184
    %p186 = scmp.ne.s32.totalorder %s175, %s178
    %p187 = scmp.eq.s32.totalorder %s18, 1
    %p188 = por %p186, %p187
    %p189 = scmp.ne.s32.totalorder %s178, %s179
    %p190 = scmp.eq.s32.totalorder %s18, 0
    %p191 = por %p189, %p190
    %p192 = scmp.ne.s32.totalorder %s178, %s179
    %p193 = scmp.eq.s32.totalorder %s19, 1
    %p194 = por %p192, %p193
    %p196 = scmp.ne.s32.totalorder %s179, %s195
    %p197 = scmp.eq.s32.totalorder %s19, 0
    %p198 = por %p196, %p197
    %p199 = scmp.le.s32.totalorder 1, %s13
    %p200 = scmp.lt.s32.totalorder %s13, 3
    %p201 = pnand %p199, %p200
    %p202 = pneg %p201
    // Predicated region
    $region9: #{gsf_forward.1} parent=5 // pred_check
      _
    $region10: #{gsf_forward.1} parent=5 // pred_check_branch
      %204 = sbr.rel (%p201) target = $region12
    $region11: #{gsf_forward.1} parent=5 // pred_region
      %s205 = ssub.s32 %s13, 1
      // Predicated region
      $region13: #{gsf_forward.1} parent=11 // pred_check
        %p206 = pneg %p60
      $region14: #{gsf_forward.1} parent=11 // pred_check_branch
        %208 = sbr.rel (%p206) target = $region16
      $region15: #{gsf_forward.1} parent=11 // pred_region
        _
      $region16: #{gsf_forward.1} parent=11 // pred_fallthru
        _
      // Predicated region
      $region17: #{gsf_forward.1} parent=11 // pred_check
        %p209 = pneg %p81
      $region18: #{gsf_forward.1} parent=11 // pred_check_branch
        %211 = sbr.rel (%p209) target = $region20
      $region19: #{gsf_forward.1} parent=11 // pred_region
        _
      $region20: #{gsf_forward.1} parent=11 // pred_fallthru
        _
      // Predicated region
      $region21: #{gsf_forward.1} parent=11 // pred_check
        %p212 = pneg %p102
      $region22: #{gsf_forward.1} parent=11 // pred_check_branch
        %214 = sbr.rel (%p212) target = $region24
      $region23: #{gsf_forward.1} parent=11 // pred_region
        _
      $region24: #{gsf_forward.1} parent=11 // pred_fallthru
        _
      // Predicated region
      $region25: #{gsf_forward.1} parent=11 // pred_check
        %p215 = pneg %p123
      $region26: #{gsf_forward.1} parent=11 // pred_check_branch
        %217 = sbr.rel (%p215) target = $region28
      $region27: #{gsf_forward.1} parent=11 // pred_region
        _
      $region28: #{gsf_forward.1} parent=11 // pred_fallthru
        _
      // Predicated region
      $region29: #{gsf_forward.1} parent=11 // pred_check
        %p218 = pneg %p144
      $region30: #{gsf_forward.1} parent=11 // pred_check_branch
        %220 = sbr.rel (%p218) target = $region32
      $region31: #{gsf_forward.1} parent=11 // pred_region
        _
      $region32: #{gsf_forward.1} parent=11 // pred_fallthru
        _
      // Predicated region
      $region33: #{gsf_forward.1} parent=11 // pred_check
        %p221 = pneg %p165
      $region34: #{gsf_forward.1} parent=11 // pred_check_branch
        %223 = sbr.rel (%p221) target = $region36
      $region35: #{gsf_forward.1} parent=11 // pred_region
        _
      $region36: #{gsf_forward.1} parent=11 // pred_fallthru
        _
    $region12: #{gsf_forward.1} parent=5 // pred_fallthru
      _
    %p224 = scmp.lt.s32.totalorder %s13, 2
    // Predicated region
    $region37: #{gsf_forward.1} parent=5 // pred_check
      %p225 = pneg %p224
    $region38: #{gsf_forward.1} parent=5 // pred_check_branch
      %227 = sbr.rel (%p225) target = $region40
    $region39: #{gsf_forward.1} parent=5 // pred_region
      // Predicated region
      $region41: #{gsf_forward.1} parent=39 // pred_check
        %p228 = pneg %p33
      $region42: #{gsf_forward.1} parent=39 // pred_check_branch
        %230 = sbr.rel (%p228) target = $region44
      $region43: #{gsf_forward.1} parent=39 // pred_region
        %s231 = smul.u32 4, %s13
        %p232 = scmp.lt.s32.totalorder %s231, 7
        %s233 = scalar_select %p232, %s231, 7
        %s234 = smul.addr %s233, 8
        %s235 = scalar_lea.vmem %s0, %s234
        %s236 = smul.u32 4, %s13
      $region44: #{gsf_forward.1} parent=39 // pred_fallthru
        _
    $region40: #{gsf_forward.1} parent=5 // pred_fallthru
      _
    %p237 = scmp.le.s32.totalorder 1, %s13
    %p238 = scmp.lt.s32.totalorder %s13, 3
    %p239 = pnand %p237, %p238
    %p240 = pneg %p239
    // Predicated region
    $region45: #{gsf_forward.1} parent=5 // pred_check
      _
    $region46: #{gsf_forward.1} parent=5 // pred_check_branch
      %242 = sbr.rel (%p239) target = $region48
    $region47: #{gsf_forward.1} parent=5 // pred_region
      %s243 = ssub.s32 %s13, 1
      %s244 = smul.u32 4, %s18
      %p245 = scmp.lt.s32.totalorder %s244, 7
      %s246 = scalar_select %p245, %s244, 7
      %s247 = smul.addr %s246, 8
      %s248 = scalar_lea.vmem %s0, %s247
      %p249 = pneg %p39
      %p250 = pneg %p36
      %p251 = pneg %p60
      %p252 = pneg %p57
      %p253 = pneg %p81
      %p254 = pneg %p78
      %p255 = pneg %p102
      %p256 = pneg %p99
      %p257 = pneg %p123
      %p258 = pneg %p120
      %p259 = pneg %p144
      %p260 = pneg %p141
      %p261 = pneg %p165
      %p262 = pneg %p162
      %p263 = pneg %p191
      %p264 = pneg %p188
      %s265 = smul.u32 4, %s18
      %p266 = scmp.lt.s32.totalorder %s265, 7
      %s267 = scalar_select %p266, %s265, 7
      %s268 = smul.addr %s267, 8
      %s269 = scalar_lea.vmem %s7, %s268
      %s270 = smul.u32 4, %s18
      %p271 = scmp.lt.s32.totalorder %s270, 7
      %s272 = scalar_select %p271, %s270, 7
      %s273 = smul.addr %s272, 8
      %s274 = scalar_lea.vmem %s0, %s273
      %s275 = smul.u32 4, %s18
      %s276 = smul.u32 4, %s18
      %p277 = scmp.lt.s32.totalorder %s276, 7
      %s278 = scalar_select %p277, %s276, 7
      %s279 = smul.addr %s278, 8
      %s280 = scalar_lea.vmem %s7, %s279
      %s281 = smul.u32 4, %s18
      %p283 = scmp.eq.s32.totalorder %s18, 0
      // Predicated region
      $region49: #{gsf_forward.1} parent=47 // pred_check
        %p284 = pneg %p283
      $region50: #{gsf_forward.1} parent=47 // pred_check_branch
        %286 = sbr.rel (%p284) target = $region52
      $region51: #{gsf_forward.1} parent=47 // pred_region
        %vm287 = vcmask 261120
        %288 = vst.msk [vmem:[#allocation2] sm:$0xff] %vm287, 0.0
      $region52: #{gsf_forward.1} parent=47 // pred_fallthru
        _
      %v289 = vld [vmem:[%s274] sm:$0xff]
      %v290 = vld [vmem:[%s274 + $0x8] sm:$0xff]
      %v291 = vld [vmem:[%s274 + $0x10] sm:$0xff]
      %v292 = vld [vmem:[%s274 + $0x18] sm:$0xff]
      %v293 = vpack.c.bf16 %v290, %v289
      %v294 = vpack.c.bf16 %v292, %v291
      %v295 = vld [vmem:[%s1] sm:$0x3]
      %v296 = vld [vmem:[%s3] sm:$0x1]
      %v298 = vlaneseq
      %v299 = vshrl.u32 %v298, 7
      %v300 = vsub.s32 0, %v299
      %v301 = vrot.slane %v296, %v300
      %vm303 = vcmask 31744
      %v305 = vsel %vm303, %v293, 0
      %v308 = vsel %vm303, %v294, 0
      %vm310 = vcmask 1041408
      %v312 = vsel %vm310, %v295, 0
      %314 = vmatprep.subr.bf16.mxu0 0
      %315 = vmatpush1.bf16.msra.mxu0 %v312
      %316 = vmatprep.subr.bf16.mxu0 0
      %317 = vmatpush1.bf16.msra.mxu0 0
      %318 = vmatprep.subr.bf16.mxu0 0
      %319 = vmatpush1.bf16.msra.mxu0 0
      %320 = vmatprep.subr.bf16.mxu0 0
      %321 = vmatpush1.bf16.msra.mxu0 0
      %322 = vmatprep.subr.bf16.mxu0 0
      %323 = vmatpush1.bf16.msra.mxu0 0
      %324 = vmatprep.subr.bf16.mxu0 0
      %325 = vmatpush1.bf16.msra.mxu0 0
      %326 = vmatprep.subr.bf16.mxu0 0
      %327 = vmatpush1.bf16.msra.mxu0 0
      %328 = vmatprep.subr.bf16.mxu0 0
      %329 = vmatpush1.bf16.msra.mxu0 0
      %330 = vmatprep.subr.bf16.mxu0 0
      %331 = vmatpush1.bf16.msra.mxu0 0
      %332 = vmatprep.subr.bf16.mxu0 0
      %333 = vmatpush1.bf16.msra.mxu0 0
      %334 = vmatprep.subr.bf16.mxu0 0
      %335 = vmatpush1.bf16.msra.mxu0 0
      %336 = vmatprep.subr.bf16.mxu0 0
      %337 = vmatpush1.bf16.msra.mxu0 0
      %338 = vmatprep.subr.bf16.mxu0 0
      %339 = vmatpush1.bf16.msra.mxu0 0
      %340 = vmatprep.subr.bf16.mxu0 0
      %341 = vmatpush1.bf16.msra.mxu0 0
      %342 = vmatprep.subr.bf16.mxu0 0
      %343 = vmatpush1.bf16.msra.mxu0 0
      %344 = vmatprep.subr.bf16.mxu0 0
      %345 = vmatpush1.bf16.msra.mxu0 0
      %346 = vmatprep.mubr.bf16.mxu0 0
      %347 = vmatmul.mubr.bf16.gmra.mrb[0].mxu0 %v305
      %v348 = vpop.f32.mrb[0].mxu0
      %v349 = vadd.f32 %v301, %v348
      %v350 = vpop.f32.mrb[0].mxu0
      %v351 = vpop.f32.mrb[0].mxu0
      %v352 = vadd.f32 %v301, %v351
      %v353 = vpop.f32.mrb[0].mxu0
      %354 = vmatprep.mubr.bf16.mxu0 0
      %355 = vmatmul.mubr.bf16.gmra.mrb[0].mxu0 %v308
      %v356 = vpop.f32.mrb[0].mxu0
      %v357 = vadd.f32 %v301, %v356
      %v358 = vpop.f32.mrb[0].mxu0
      %v359 = vpop.f32.mrb[0].mxu0
      %v360 = vadd.f32 %v301, %v359
      %v361 = vpop.f32.mrb[0].mxu0
      %362 = vdwg.mxu0
      %vm363 = vcmask 785408
      %364 = vst.msk [vmem:[#allocation3] sm:$0xff] %vm363, %v349
      %365 = vst.msk [vmem:[#allocation3 + $0x8] sm:$0xff] %vm363, %v352
      %366 = vst.msk [vmem:[#allocation3 + $0x10] sm:$0xff] %vm363, %v357
      %367 = vst.msk [vmem:[#allocation3 + $0x18] sm:$0xff] %vm363, %v360
      %v368 = vld [vmem:[%s2] sm:$0xf]
      %v369 = vld [vmem:[%s2 + $0x4] sm:$0xf]
      %v370 = vld [vmem:[%s2 + $0x8] sm:$0xf]
      %v371 = vld [vmem:[%s2 + $0xc] sm:$0xf]
      %v372 = vld [vmem:[%s4] sm:$0xff]
      %v373 = vld [vmem:[#allocation2] sm:$0xff]
      %v374 = vld [vmem:[#allocation3] sm:$0xff]
      %v375 = vpack.c.bf16 %v373, %v373
      %v380 = vunpack.c.l.b16 %v368
      %v381 = vunpack.c.l.b16 %v369
      %v382 = vunpack.c.l.b16 %v370
      %v383 = vunpack.c.l.b16 %v371
      %v384 = vpack.c.b16 %v381, %v380
      %v385 = vpack.c.b16 %v383, %v382
      %vm388 = vcmask 261120
      %v390 = vsel %vm388, %v375, 0
      %392 = vmatprep.subr.bf16.mxu0 0
      %393 = vmatpush1.bf16.msra.mxu0 %v384
      %394 = vmatprep.subr.bf16.mxu0 0
      %395 = vmatpush1.bf16.msra.mxu0 %v385
      %396 = vmatprep.subr.bf16.mxu0 0
      %397 = vmatpush1.bf16.msra.mxu0 0
      %398 = vmatprep.subr.bf16.mxu0 0
      %399 = vmatpush1.bf16.msra.mxu0 0
      %400 = vmatprep.subr.bf16.mxu0 0
      %401 = vmatpush1.bf16.msra.mxu0 0
      %402 = vmatprep.subr.bf16.mxu0 0
      %403 = vmatpush1.bf16.msra.mxu0 0
      %404 = vmatprep.subr.bf16.mxu0 0
      %405 = vmatpush1.bf16.msra.mxu0 0
      %406 = vmatprep.subr.bf16.mxu0 0
      %407 = vmatpush1.bf16.msra.mxu0 0
      %408 = vmatprep.subr.bf16.mxu0 0
      %409 = vmatpush1.bf16.msra.mxu0 0
      %410 = vmatprep.subr.bf16.mxu0 0
      %411 = vmatpush1.bf16.msra.mxu0 0
      %412 = vmatprep.subr.bf16.mxu0 0
      %413 = vmatpush1.bf16.msra.mxu0 0
      %414 = vmatprep.subr.bf16.mxu0 0
      %415 = vmatpush1.bf16.msra.mxu0 0
      %416 = vmatprep.subr.bf16.mxu0 0
      %417 = vmatpush1.bf16.msra.mxu0 0
      %418 = vmatprep.subr.bf16.mxu0 0
      %419 = vmatpush1.bf16.msra.mxu0 0
      %420 = vmatprep.subr.bf16.mxu0 0
      %421 = vmatpush1.bf16.msra.mxu0 0
      %422 = vmatprep.subr.bf16.mxu0 0
      %423 = vmatpush1.bf16.msra.mxu0 0
      %424 = vmatprep.mubr.bf16.mxu0 0
      %425 = vmatmul.mubr.bf16.gmra.mrb[0].mxu0 %v390
      %v426 = vpop.f32.mrb[0].mxu0
      %v427 = vadd.f32 0.0, %v426
      %v428 = vpop.f32.mrb[0].mxu0
      %v429 = vpop.f32.mrb[0].mxu0
      %v430 = vpop.f32.mrb[0].mxu0
      %431 = vdwg.mxu0
      %v432 = vadd.f32 %v374, %v427
      %v433 = vxor.u32 %v432, 2147483648
      %v434 = vmul.f32 %v433, 1.442695
      %v435 = vpow.pop %v434
      %v436 = vadd.f32 %v435, 1.0
      %v437 = vrcp.pop %v436
      %v438 = vmul.f32 1.0, %v437
      %440 = vrot.lane.b32.xlu0 %v372, 64
      %v441 = vpop.permute.xlu0 %440
      %v443 = vadd.f32 %v427, %v441
      %445 = vrot.lane.b32.xlu0 %v443, 64
      %v446 = vpop.permute.xlu0 %445
      %v448 = vmul.f32 %v438, %v446
      %450 = vrot.lane.b32.xlu0 %v448, 64
      %v451 = vpop.permute.xlu0 %450
      %v453 = vadd.f32 %v374, %v451
      %v454 = vtanh.pop %v453
      %v455 = vsub.f32 1.0, %v438
      %457 = vrot.lane.b32.xlu0 %v454, 96
      %v458 = vpop.permute.xlu0 %457
      %v460 = vmul.f32 %v455, %v458
      %462 = vrot.lane.b32.xlu0 %v373, 32
      %v463 = vpop.permute.xlu0 %462
      %v465 = vmul.f32 %v438, %v463
      %v466 = vadd.f32 %v460, %v465
      %468 = vrot.lane.b32.xlu0 %v466, 96
      %v469 = vpop.permute.xlu0 %468
      %471 = vst.msk [vmem:[#allocation4] sm:$0xff] %vm388, %v469
      %s472 = scalar_lea.vmem [#allocation3], 8
      %v473 = vld [vmem:[%s472] sm:$0xff]
      %v474 = vpack.c.bf16 %v466, %v466
      %476 = vrot.lane.b32.xlu0 %v474, 96
      %v477 = vpop.permute.xlu0 %476
      %v479 = vsel %vm388, %v477, 0
      %481 = vmatprep.subr.bf16.mxu0 0
      %482 = vmatpush1.bf16.msra.mxu0 %v384
      %483 = vmatprep.subr.bf16.mxu0 0
      %484 = vmatpush1.bf16.msra.mxu0 %v385
      %485 = vmatprep.subr.bf16.mxu0 0
      %486 = vmatpush1.bf16.msra.mxu0 0
      %487 = vmatprep.subr.bf16.mxu0 0
      %488 = vmatpush1.bf16.msra.mxu0 0
      %489 = vmatprep.subr.bf16.mxu0 0
      %490 = vmatpush1.bf16.msra.mxu0 0
      %491 = vmatprep.subr.bf16.mxu0 0
      %492 = vmatpush1.bf16.msra.mxu0 0
      %493 = vmatprep.subr.bf16.mxu0 0
      %494 = vmatpush1.bf16.msra.mxu0 0
      %495 = vmatprep.subr.bf16.mxu0 0
      %496 = vmatpush1.bf16.msra.mxu0 0
      %497 = vmatprep.subr.bf16.mxu0 0
      %498 = vmatpush1.bf16.msra.mxu0 0
      %499 = vmatprep.subr.bf16.mxu0 0
      %500 = vmatpush1.bf16.msra.mxu0 0
      %501 = vmatprep.subr.bf16.mxu0 0
      %502 = vmatpush1.bf16.msra.mxu0 0
      %503 = vmatprep.subr.bf16.mxu0 0
      %504 = vmatpush1.bf16.msra.mxu0 0
      %505 = vmatprep.subr.bf16.mxu0 0
      %506 = vmatpush1.bf16.msra.mxu0 0
      %507 = vmatprep.subr.bf16.mxu0 0
      %508 = vmatpush1.bf16.msra.mxu0 0
      %509 = vmatprep.subr.bf16.mxu0 0
      %510 = vmatpush1.bf16.msra.mxu0 0
      %511 = vmatprep.subr.bf16.mxu0 0
      %512 = vmatpush1.bf16.msra.mxu0 0
      %513 = vmatprep.mubr.bf16.mxu0 0
      %514 = vmatmul.mubr.bf16.gmra.mrb[0].mxu0 %v479
      %v515 = vpop.f32.mrb[0].mxu0
      %v516 = vadd.f32 0.0, %v515
      %v517 = vpop.f32.mrb[0].mxu0
      %v518 = vpop.f32.mrb[0].mxu0
      %v519 = vpop.f32.mrb[0].mxu0
      %520 = vdwg.mxu0
      %v521 = vadd.f32 %v473, %v516
      %v522 = vxor.u32 %v521, 2147483648
      %v523 = vmul.f32 %v522, 1.442695
      %v524 = vpow.pop %v523
      %v525 = vadd.f32 %v524, 1.0
      %v526 = vrcp.pop %v525
      %v527 = vmul.f32 1.0, %v526
      %v528 = vadd.f32 %v516, %v441
      %530 = vrot.lane.b32.xlu0 %v528, 64
      %v531 = vpop.permute.xlu0 %530
      %v533 = vmul.f32 %v527, %v531
      %535 = vrot.lane.b32.xlu0 %v533, 64
      %v536 = vpop.permute.xlu0 %535
      %v538 = vadd.f32 %v473, %v536
      %v539 = vtanh.pop %v538
      %v540 = vsub.f32 1.0, %v527
      %542 = vrot.lane.b32.xlu0 %v539, 96
      %v543 = vpop.permute.xlu0 %542
      %v545 = vmul.f32 %v540, %v543
      %v546 = vmul.f32 %v527, %v466
      %v547 = vadd.f32 %v545, %v546
      %549 = vrot.lane.b32.xlu0 %v547, 96
      %v550 = vpop.permute.xlu0 %549
      %s552 = scalar_lea.vmem [#allocation4], 8
      %553 = vst.msk [vmem:[%s552] sm:$0xff] %vm388, %v550
      %s554 = scalar_lea.vmem [#allocation3], 16
      %v555 = vld [vmem:[%s554] sm:$0xff]
      %v556 = vpack.c.bf16 %v547, %v547
      %558 = vrot.lane.b32.xlu0 %v556, 96
      %v559 = vpop.permute.xlu0 %558
      %v561 = vsel %vm388, %v559, 0
      %563 = vmatprep.subr.bf16.mxu0 0
      %564 = vmatpush1.bf16.msra.mxu0 %v384
      %565 = vmatprep.subr.bf16.mxu0 0
      %566 = vmatpush1.bf16.msra.mxu0 %v385
      %567 = vmatprep.subr.bf16.mxu0 0
      %568 = vmatpush1.bf16.msra.mxu0 0
      %569 = vmatprep.subr.bf16.mxu0 0
      %570 = vmatpush1.bf16.msra.mxu0 0
      %571 = vmatprep.subr.bf16.mxu0 0
      %572 = vmatpush1.bf16.msra.mxu0 0
      %573 = vmatprep.subr.bf16.mxu0 0
      %574 = vmatpush1.bf16.msra.mxu0 0
      %575 = vmatprep.subr.bf16.mxu0 0
      %576 = vmatpush1.bf16.msra.mxu0 0
      %577 = vmatprep.subr.bf16.mxu0 0
      %578 = vmatpush1.bf16.msra.mxu0 0
      %579 = vmatprep.subr.bf16.mxu0 0
      %580 = vmatpush1.bf16.msra.mxu0 0
      %581 = vmatprep.subr.bf16.mxu0 0
      %582 = vmatpush1.bf16.msra.mxu0 0
      %583 = vmatprep.subr.bf16.mxu0 0
      %584 = vmatpush1.bf16.msra.mxu0 0
      %585 = vmatprep.subr.bf16.mxu0 0
      %586 = vmatpush1.bf16.msra.mxu0 0
      %587 = vmatprep.subr.bf16.mxu0 0
      %588 = vmatpush1.bf16.msra.mxu0 0
      %589 = vmatprep.subr.bf16.mxu0 0
      %590 = vmatpush1.bf16.msra.mxu0 0
      %591 = vmatprep.subr.bf16.mxu0 0
      %592 = vmatpush1.bf16.msra.mxu0 0
      %593 = vmatprep.subr.bf16.mxu0 0
      %594 = vmatpush1.bf16.msra.mxu0 0
      %595 = vmatprep.mubr.bf16.mxu0 0
      %596 = vmatmul.mubr.bf16.gmra.mrb[0].mxu0 %v561
      %v597 = vpop.f32.mrb[0].mxu0
      %v598 = vadd.f32 0.0, %v597
      %v599 = vpop.f32.mrb[0].mxu0
      %v600 = vpop.f32.mrb[0].mxu0
      %v601 = vpop.f32.mrb[0].mxu0
      %602 = vdwg.mxu0
      %v603 = vadd.f32 %v555, %v598
      %v604 = vxor.u32 %v603, 2147483648
      %v605 = vmul.f32 %v604, 1.442695
      %v606 = vpow.pop %v605
      %v607 = vadd.f32 %v606, 1.0
      %v608 = vrcp.pop %v607
      %v609 = vmul.f32 1.0, %v608
      %v610 = vadd.f32 %v598, %v441
      %612 = vrot.lane.b32.xlu0 %v610, 64
      %v613 = vpop.permute.xlu0 %612
      %v615 = vmul.f32 %v609, %v613
      %617 = vrot.lane.b32.xlu0 %v615, 64
      %v618 = vpop.permute.xlu0 %617
      %v620 = vadd.f32 %v555, %v618
      %v621 = vtanh.pop %v620
      %v622 = vsub.f32 1.0, %v609
      %624 = vrot.lane.b32.xlu0 %v621, 96
      %v625 = vpop.permute.xlu0 %624
      %v627 = vmul.f32 %v622, %v625
      %v628 = vmul.f32 %v609, %v547
      %v629 = vadd.f32 %v627, %v628
      %631 = vrot.lane.b32.xlu0 %v629, 96
      %v632 = vpop.permute.xlu0 %631
      %s634 = scalar_lea.vmem [#allocation4], 16
      %635 = vst.msk [vmem:[%s634] sm:$0xff] %vm388, %v632
      %s636 = scalar_lea.vmem [#allocation3], 24
      %v637 = vld [vmem:[%s636] sm:$0xff]
      %v638 = vpack.c.bf16 %v629, %v629
      %640 = vrot.lane.b32.xlu0 %v638, 96
      %v641 = vpop.permute.xlu0 %640
      %v643 = vsel %vm388, %v641, 0
      %645 = vmatprep.subr.bf16.mxu0 0
      %646 = vmatpush1.bf16.msra.mxu0 %v384
      %647 = vmatprep.subr.bf16.mxu0 0
      %648 = vmatpush1.bf16.msra.mxu0 %v385
      %649 = vmatprep.subr.bf16.mxu0 0
      %650 = vmatpush1.bf16.msra.mxu0 0
      %651 = vmatprep.subr.bf16.mxu0 0
      %652 = vmatpush1.bf16.msra.mxu0 0
      %653 = vmatprep.subr.bf16.mxu0 0
      %654 = vmatpush1.bf16.msra.mxu0 0
      %655 = vmatprep.subr.bf16.mxu0 0
      %656 = vmatpush1.bf16.msra.mxu0 0
      %657 = vmatprep.subr.bf16.mxu0 0
      %658 = vmatpush1.bf16.msra.mxu0 0
      %659 = vmatprep.subr.bf16.mxu0 0
      %660 = vmatpush1.bf16.msra.mxu0 0
      %661 = vmatprep.subr.bf16.mxu0 0
      %662 = vmatpush1.bf16.msra.mxu0 0
      %663 = vmatprep.subr.bf16.mxu0 0
      %664 = vmatpush1.bf16.msra.mxu0 0
      %665 = vmatprep.subr.bf16.mxu0 0
      %666 = vmatpush1.bf16.msra.mxu0 0
      %667 = vmatprep.subr.bf16.mxu0 0
      %668 = vmatpush1.bf16.msra.mxu0 0
      %669 = vmatprep.subr.bf16.mxu0 0
      %670 = vmatpush1.bf16.msra.mxu0 0
      %671 = vmatprep.subr.bf16.mxu0 0
      %672 = vmatpush1.bf16.msra.mxu0 0
      %673 = vmatprep.subr.bf16.mxu0 0
      %674 = vmatpush1.bf16.msra.mxu0 0
      %675 = vmatprep.subr.bf16.mxu0 0
      %676 = vmatpush1.bf16.msra.mxu0 0
      %677 = vmatprep.mubr.bf16.mxu0 0
      %678 = vmatmul.mubr.bf16.gmra.mrb[0].mxu0 %v643
      %v679 = vpop.f32.mrb[0].mxu0
      %v680 = vadd.f32 0.0, %v679
      %v681 = vpop.f32.mrb[0].mxu0
      %v682 = vpop.f32.mrb[0].mxu0
      %v683 = vpop.f32.mrb[0].mxu0
      %684 = vdwg.mxu0
      %v685 = vadd.f32 %v637, %v680
      %v686 = vxor.u32 %v685, 2147483648
      %v687 = vmul.f32 %v686, 1.442695
      %v688 = vpow.pop %v687
      %v689 = vadd.f32 %v688, 1.0
      %v690 = vrcp.pop %v689
      %v691 = vmul.f32 1.0, %v690
      %v692 = vadd.f32 %v680, %v441
      %694 = vrot.lane.b32.xlu0 %v692, 64
      %v695 = vpop.permute.xlu0 %694
      %v697 = vmul.f32 %v691, %v695
      %699 = vrot.lane.b32.xlu0 %v697, 64
      %v700 = vpop.permute.xlu0 %699
      %v702 = vadd.f32 %v637, %v700
      %v703 = vtanh.pop %v702
      %v704 = vsub.f32 1.0, %v691
      %706 = vrot.lane.b32.xlu0 %v703, 96
      %v707 = vpop.permute.xlu0 %706
      %v709 = vmul.f32 %v704, %v707
      %v710 = vmul.f32 %v691, %v629
      %v711 = vadd.f32 %v709, %v710
      %713 = vrot.lane.b32.xlu0 %v711, 96
      %v714 = vpop.permute.xlu0 %713
      %s716 = scalar_lea.vmem [#allocation4], 24
      %717 = vst.msk [vmem:[%s716] sm:$0xff] %vm388, %v714
      %718 = vst.msk [vmem:[#allocation2] sm:$0xff] %vm388, %v714
      %v719 = vld [vmem:[#allocation4] sm:$0xff]
      %v720 = vld [vmem:[#allocation4 + $0x8] sm:$0xff]
      %v721 = vld [vmem:[#allocation4 + $0x10] sm:$0xff]
      %v722 = vld [vmem:[#allocation4 + $0x18] sm:$0xff]
      %v723 = vpack.c.bf16 %v720, %v719
      %v724 = vpack.c.bf16 %v722, %v721
      %v725 = vld [vmem:[%s5] sm:$0xf]
      %v726 = vld [vmem:[%s5 + $0x4] sm:$0xf]
      %v727 = vld [vmem:[%s5 + $0x8] sm:$0xf]
      %v728 = vld [vmem:[%s5 + $0xc] sm:$0xf]
      %v729 = vld [vmem:[%s6] sm:$0x1]
      %v731 = vlaneseq
      %v732 = vshrl.u32 %v731, 7
      %v733 = vsub.s32 0, %v732
      %v734 = vrot.slane %v729, %v733
      %v740 = vunpack.c.l.b16 %v725
      %v741 = vunpack.c.l.b16 %v726
      %v742 = vunpack.c.l.b16 %v727
      %v743 = vunpack.c.l.b16 %v728
      %v744 = vpack.c.b16 %v741, %v740
      %v745 = vpack.c.b16 %v743, %v742
      %v749 = vsel %vm388, %v723, 0
      %v752 = vsel %vm388, %v724, 0
      %754 = vmatprep.subr.bf16.mxu0 0
      %755 = vmatpush1.bf16.msra.mxu0 %v744
      %756 = vmatprep.subr.bf16.mxu0 0
      %757 = vmatpush1.bf16.msra.mxu0 %v745
      %758 = vmatprep.subr.bf16.mxu0 0
      %759 = vmatpush1.bf16.msra.mxu0 0
      %760 = vmatprep.subr.bf16.mxu0 0
      %761 = vmatpush1.bf16.msra.mxu0 0
      %762 = vmatprep.subr.bf16.mxu0 0
      %763 = vmatpush1.bf16.msra.mxu0 0
      %764 = vmatprep.subr.bf16.mxu0 0
      %765 = vmatpush1.bf16.msra.mxu0 0
      %766 = vmatprep.subr.bf16.mxu0 0
      %767 = vmatpush1.bf16.msra.mxu0 0
      %768 = vmatprep.subr.bf16.mxu0 0
      %769 = vmatpush1.bf16.msra.mxu0 0
      %770 = vmatprep.subr.bf16.mxu0 0
      %771 = vmatpush1.bf16.msra.mxu0 0
      %772 = vmatprep.subr.bf16.mxu0 0
      %773 = vmatpush1.bf16.msra.mxu0 0
      %774 = vmatprep.subr.bf16.mxu0 0
      %775 = vmatpush1.bf16.msra.mxu0 0
      %776 = vmatprep.subr.bf16.mxu0 0
      %777 = vmatpush1.bf16.msra.mxu0 0
      %778 = vmatprep.subr.bf16.mxu0 0
      %779 = vmatpush1.bf16.msra.mxu0 0
      %780 = vmatprep.subr.bf16.mxu0 0
      %781 = vmatpush1.bf16.msra.mxu0 0
      %782 = vmatprep.subr.bf16.mxu0 0
      %783 = vmatpush1.bf16.msra.mxu0 0
      %784 = vmatprep.subr.bf16.mxu0 0
      %785 = vmatpush1.bf16.msra.mxu0 0
      %786 = vmatprep.mubr.bf16.mxu0 0
      %787 = vmatmul.mubr.bf16.gmra.mrb[0].mxu0 %v749
      %v788 = vpop.f32.mrb[0].mxu0
      %v789 = vadd.f32 %v734, %v788
      %v790 = vpop.f32.mrb[0].mxu0
      %v791 = vpop.f32.mrb[0].mxu0
      %v792 = vadd.f32 %v734, %v791
      %v793 = vpop.f32.mrb[0].mxu0
      %794 = vmatprep.mubr.bf16.mxu0 0
      %795 = vmatmul.mubr.bf16.gmra.mrb[0].mxu0 %v752
      %v796 = vpop.f32.mrb[0].mxu0
      %v797 = vadd.f32 %v734, %v796
      %v798 = vpop.f32.mrb[0].mxu0
      %v799 = vpop.f32.mrb[0].mxu0
      %v800 = vadd.f32 %v734, %v799
      %v801 = vpop.f32.mrb[0].mxu0
      %802 = vdwg.mxu0
      %803 = vst.msk [vmem:[%s280] sm:$0xff] %vm303, %v789
      %804 = vst.msk [vmem:[%s280 + $0x8] sm:$0xff] %vm303, %v792
      %805 = vst.msk [vmem:[%s280 + $0x10] sm:$0xff] %vm303, %v797
      %806 = vst.msk [vmem:[%s280 + $0x18] sm:$0xff] %vm303, %v800
      %s807 = smul.u32 4, %s18
      %p808 = scmp.lt.s32.totalorder %s807, 7
      %s809 = scalar_select %p808, %s807, 7
      %s810 = smul.addr %s809, 8
      %s811 = scalar_lea.vmem %s7, %s810
      // Predicated region
      $region53: #{gsf_forward.1} parent=47 // pred_check
        %p812 = pneg %p188
      $region54: #{gsf_forward.1} parent=47 // pred_check_branch
        %814 = sbr.rel (%p812) target = $region56
      $region55: #{gsf_forward.1} parent=47 // pred_region
        %s815 = smul.u32 4, %s18
      $region56: #{gsf_forward.1} parent=47 // pred_fallthru
        _
    $region48: #{gsf_forward.1} parent=5 // pred_fallthru
      _
    %p816 = scmp.le.s32.totalorder 2, %s13
    // Predicated region
    $region57: #{gsf_forward.1} parent=5 // pred_check
      %p817 = pneg %p816
    $region58: #{gsf_forward.1} parent=5 // pred_check_branch
      %819 = sbr.rel (%p817) target = $region60
    $region59: #{gsf_forward.1} parent=5 // pred_region
      %s820 = ssub.s32 %s13, 2
      // Predicated region
      $region61: #{gsf_forward.1} parent=59 // pred_check
        %p821 = pneg %p194
      $region62: #{gsf_forward.1} parent=59 // pred_check_branch
        %823 = sbr.rel (%p821) target = $region64
      $region63: #{gsf_forward.1} parent=59 // pred_region
        %s824 = smul.u32 4, %s19
        %p825 = scmp.lt.s32.totalorder %s824, 7
        %s826 = scalar_select %p825, %s824, 7
        %s827 = smul.addr %s826, 8
        %s828 = scalar_lea.vmem %s7, %s827
      $region64: #{gsf_forward.1} parent=59 // pred_fallthru
        _
    $region60: #{gsf_forward.1} parent=5 // pred_fallthru
      _
  $region6: #{gsf_forward.1} parent=0 // loop_footer
    %s17 = sadd.s32 1, %s13
  $region7: #{gsf_forward.1} parent=0 // loop_footer_branch
    %12 = sbr.rel target = $region3
  $region8: #{gsf_forward.1} parent=0 // loop_exit
    _

</llo_original>
